<compile_context>
chip_gen: v5e
topology: v5e:2x2
jax: 0.10.0
libtpu: 0.0.40
codegen_flags: <defaults>
</compile_context>

<pallas_src>
import functools

import jax
import jax.numpy as jnp
from jax import lax
from jax.experimental import pallas as pl
from jax.experimental.pallas import tpu as pltpu


# ----------------------------- fused RNN + FC kernel --------------------------
def _rnn_fc_kernel(x_ref, wih_ref, whh_ref, b_ref, wfc_ref, bfc_ref,
                   out_ref, xp_ref, *, seq_len):
    # x_ref  : (T, TB, E)   time-major input tile
    # wih_ref: (E, H)       pre-transposed input->hidden weight
    # whh_ref: (H, H)       pre-transposed hidden->hidden weight
    # b_ref  : (1, H)       b_ih + b_hh
    # wfc_ref: (H, Vp)      pre-transposed fc weight, lane-padded to Vp
    # bfc_ref: (1, Vp)      fc bias, lane-padded
    # out_ref: (T, TB, Vp)  time-major logits tile
    # xp_ref : (T, TB, H)   VMEM scratch: hoisted input projection
    T = seq_len
    TB = x_ref.shape[1]
    H = whh_ref.shape[0]

    # Hoisted input projection: ONE matmul for all timesteps, written straight
    # into VMEM scratch (bounds live ranges; per-step read is contiguous).
    xp_ref[...] = (
        lax.dot_general(x_ref[...], wih_ref[...],
                        dimension_numbers=(((2,), (0,)), ((), ())),
                        preferred_element_type=jnp.float32)
        + b_ref[...])                                             # (T, TB, H)

    # Hoist weight/bias loads out of the recurrence (refs are mutable -> not
    # reliably CSE'd across iterations).
    whh = whh_ref[...]
    wfc = wfc_ref[...]
    bfc = bfc_ref[...]

    def step(t, h):
        xp_t = xp_ref[t]                                          # (TB, H), contiguous
        h = jnp.tanh(xp_t + jnp.dot(h, whh,
                                    preferred_element_type=jnp.float32))
        # Interleaved fc: fills MXU bubbles of the latency-bound recurrence,
        # and the hidden sequence never needs to be materialized.
        out_ref[t] = (jnp.dot(h, wfc, preferred_element_type=jnp.float32)
                      + bfc)                                      # (TB, Vp) unmasked store
        return h

    lax.fori_loop(0, T, step, jnp.zeros((TB, H), jnp.float32), unroll=True)


# ------------------------------------ wrapper ----------------------------------
def _pick_batch_tile(Bp, T, E, H, Vp, budget_bytes=24 << 20):
    """Largest batch tile (multiple of 8, divisor of Bp) under a VMEM budget
    (2x double-buffered x/out tiles + xproj scratch). Conservative enough for
    v7x's 64 MiB VMEM / 32 MiB default scoped limit."""
    best = 8
    for tb in range(8, Bp + 1, 8):
        if Bp % tb:
            continue
        per_tile = 4 * (2 * T * tb * E + 2 * T * tb * Vp + T * tb * H)
        if per_tile <= budget_bytes:
            best = tb
    return best


def simple_rnn_forward(params, x):
    """x: (B, T, input_dim) f32 -> logits (B, T, output_dim) f32."""
    B, T, E = x.shape
    H = params["w_hh"].shape[0]
    V = params["fc_w"].shape[0]

    # Lane-dense output width; >=8-row (sublane-aligned) batch for MXU LHS.
    Vp = ((V + 127) // 128) * 128
    Bp = ((max(B, 8) + 7) // 8) * 8
    TB = _pick_batch_tile(Bp, T, E, H, Vp)

    # One-time layout prep (tiny XLA ops, outside the kernel).
    x_p = jnp.pad(x, ((0, Bp - B), (0, 0), (0, 0)))       # zero-pad batch
    x_tm = jnp.transpose(x_p, (1, 0, 2))                  # (T, Bp, E) time-major
    wih_t = params["w_ih"].T                               # (E, H)
    whh_t = params["w_hh"].T                               # (H, H)
    b2d = (params["b_ih"] + params["b_hh"]).reshape(1, H)
    wfc_t = jnp.pad(params["fc_w"].T, ((0, 0), (0, Vp - V)))      # (H, Vp)
    bfc2d = jnp.pad(params["fc_b"], ((0, Vp - V),)).reshape(1, Vp)
    # TODO(synk): at real sizes on v6e/v7x cast x/W_ih/W_hh/W_fc to bf16 here
    # (keep f32 accumulation + f32 tanh); kept f32 to match nn.RNN numerics.

    kernel = functools.partial(_rnn_fc_kernel, seq_len=T)

    grid_spec = pltpu.PrefetchScalarGridSpec(
        num_scalar_prefetch=0,
        grid=(Bp // TB,),                                   # parallel over batch tiles
        in_specs=[
            pl.BlockSpec((T, TB, E), lambda i: (0, i, 0)),
            pl.BlockSpec((E, H), lambda i: (0, 0)),
            pl.BlockSpec((H, H), lambda i: (0, 0)),
            pl.BlockSpec((1, H), lambda i: (0, 0)),
            pl.BlockSpec((H, Vp), lambda i: (0, 0)),
            pl.BlockSpec((1, Vp), lambda i: (0, 0)),
        ],
        out_specs=pl.BlockSpec((T, TB, Vp), lambda i: (0, i, 0)),
        scratch_shapes=[pltpu.VMEM((T, TB, H), jnp.float32)],
    )
    out_tm = pl.pallas_call(
        kernel,
        out_shape=jax.ShapeDtypeStruct((T, Bp, Vp), jnp.float32),
        grid_spec=grid_spec,
        compiler_params=pltpu.CompilerParams(
            dimension_semantics=("parallel",)),
    )(x_tm, wih_t, whh_t, b2d, wfc_t, bfc2d)

    # Back to batch-first, strip batch/vocab padding (cheap XLA ops).
    return jnp.transpose(out_tm, (1, 0, 2))[:B, :, :V]     # (B, T, V)


# --------------------------------- params & reference -------------------------
def init_params(key, input_dim, hidden_dim, output_dim):
    ks = jax.random.split(key, 6)
    s = 1.0 / jnp.sqrt(hidden_dim)
    return {
        "w_ih": jax.random.uniform(ks[0], (hidden_dim, input_dim), jnp.float32, -s, s),
        "w_hh": jax.random.uniform(ks[1], (hidden_dim, hidden_dim), jnp.float32, -s, s),
        "b_ih": jax.random.uniform(ks[2], (hidden_dim,), jnp.float32, -s, s),
        "b_hh": jax.random.uniform(ks[3], (hidden_dim,), jnp.float32, -s, s),
        "fc_w": jax.random.uniform(ks[4], (output_dim, hidden_dim), jnp.float32, -s, s),
        "fc_b": jax.random.uniform(ks[5], (output_dim,), jnp.float32, -s, s),
    }


def reference_forward(params, x):
    """Pure-JAX reference matching torch.nn.RNN(tanh, batch_first) + Linear."""
    B, T, _ = x.shape
    H = params["w_hh"].shape[0]
    h = jnp.zeros((B, H), jnp.float32)
    outs = []
    for t in range(T):
        h = jnp.tanh(x[:, t, :] @ params["w_ih"].T + params["b_ih"]
                     + h @ params["w_hh"].T + params["b_hh"])
        outs.append(h)
    rnn_out = jnp.stack(outs, axis=1)                    # (B, T, H)
    return rnn_out @ params["fc_w"].T + params["fc_b"]   # (B, T, V)


# ----------------------------------- main --------------------------------------
if __name__ == "__main__":
    input_dim, hidden_dim, output_dim = 16, 32, 8
    B, T = 2, 8

    key = jax.random.PRNGKey(0)
    pkey, xkey = jax.random.split(key)
    params = init_params(pkey, input_dim, hidden_dim, output_dim)
    x = jax.random.normal(xkey, (B, T, input_dim), jnp.float32)

    out = simple_rnn_forward(params, x)
    jax.block_until_ready(out)
    assert out.shape == (B, T, output_dim)

    ref = reference_forward(params, x)
    max_err = float(jnp.max(jnp.abs(out - ref)))
    assert jnp.allclose(out, ref, atol=1e-4, rtol=1e-4), max_err

    print("KERNEL_OK")
</pallas_src>

<mosaic_0001>
module attributes {stable_mosaic.version = 11 : i64} {
  func.func @_rnn_fc_kernel(%arg0: i32, %arg1: memref<8x8x16xf32, #tpu.memory_space<vmem>>, %arg2: memref<16x32xf32, #tpu.memory_space<vmem>>, %arg3: memref<32x32xf32, #tpu.memory_space<vmem>>, %arg4: memref<1x32xf32, #tpu.memory_space<vmem>>, %arg5: memref<32x128xf32, #tpu.memory_space<vmem>>, %arg6: memref<1x128xf32, #tpu.memory_space<vmem>>, %arg7: memref<8x8x128xf32, #tpu.memory_space<vmem>>, %arg8: memref<8x8x32xf32, #tpu.memory_space<vmem>>) attributes {dimension_semantics = [#tpu.dimension_semantics<parallel>], iteration_bounds = array<i64: 1>, scalar_prefetch = 0 : i64, scratch_operands = 1 : i64, tpu.core_type = #tpu.core_type<tc>, window_params = [{transform_indices = @transform_0, window_bounds = array<i64: 8, 8, 16>}, {pipeline_mode = #tpu.pipeline_mode<synchronous>, transform_indices = @transform_1, window_bounds = array<i64: 16, 32>}, {pipeline_mode = #tpu.pipeline_mode<synchronous>, transform_indices = @transform_2, window_bounds = array<i64: 32, 32>}, {pipeline_mode = #tpu.pipeline_mode<synchronous>, transform_indices = @transform_3, window_bounds = array<i64: 1, 32>}, {pipeline_mode = #tpu.pipeline_mode<synchronous>, transform_indices = @transform_4, window_bounds = array<i64: 32, 128>}, {pipeline_mode = #tpu.pipeline_mode<synchronous>, transform_indices = @transform_5, window_bounds = array<i64: 1, 128>}, {transform_indices = @transform_6, window_bounds = array<i64: 8, 8, 128>}]} {
    %c0 = arith.constant 0 : index
    %c0_0 = arith.constant 0 : index
    %c0_1 = arith.constant 0 : index
    %0 = vector.load %arg1[%c0, %c0_0, %c0_1] : memref<8x8x16xf32, #tpu.memory_space<vmem>>, vector<8x8x16xf32>
    %c0_2 = arith.constant 0 : index
    %c0_3 = arith.constant 0 : index
    %1 = vector.load %arg2[%c0_2, %c0_3] : memref<16x32xf32, #tpu.memory_space<vmem>>, vector<16x32xf32>
    %cst = arith.constant dense<0.000000e+00> : vector<8x8x32xf32>
    %2 = tpu.matmul %0, %1, %cst {dimension_numbers = #tpu.dot_dimension_numbers<[2], [0], [0, 1], [1], [0, 0, 0, 1, 1, 1], [], []>} : vector<8x8x16xf32>, vector<16x32xf32>, vector<8x8x32xf32> -> vector<8x8x32xf32>
    %c0_4 = arith.constant 0 : index
    %c0_5 = arith.constant 0 : index
    %3 = vector.load %arg4[%c0_4, %c0_5] : memref<1x32xf32, #tpu.memory_space<vmem>>, vector<1x32xf32>
    %4 = vector.shape_cast %3 : vector<1x32xf32> to vector<1x1x32xf32>
    %5 = vector.broadcast %4 : vector<1x1x32xf32> to vector<8x8x32xf32>
    %6 = arith.addf %2, %5 : vector<8x8x32xf32>
    %c0_6 = arith.constant 0 : index
    %c0_7 = arith.constant 0 : index
    %c0_8 = arith.constant 0 : index
    %7 = vector.load %arg8[%c0_6, %c0_7, %c0_8] : memref<8x8x32xf32, #tpu.memory_space<vmem>>, vector<8x8x32xf32>
    tpu.vector_store %arg8[%c0_6, %c0_7, %c0_8], %6 {strides = array<i32>} : memref<8x8x32xf32, #tpu.memory_space<vmem>>, vector<8x8x32xf32>,
    %c0_9 = arith.constant 0 : index
    %c0_10 = arith.constant 0 : index
    %8 = vector.load %arg3[%c0_9, %c0_10] : memref<32x32xf32, #tpu.memory_space<vmem>>, vector<32x32xf32>
    %c0_11 = arith.constant 0 : index
    %c0_12 = arith.constant 0 : index
    %9 = vector.load %arg5[%c0_11, %c0_12] : memref<32x128xf32, #tpu.memory_space<vmem>>, vector<32x128xf32>
    %c0_13 = arith.constant 0 : index
    %c0_14 = arith.constant 0 : index
    %10 = vector.load %arg6[%c0_13, %c0_14] : memref<1x128xf32, #tpu.memory_space<vmem>>, vector<1x128xf32>
    %cst_15 = arith.constant 0.000000e+00 : f32
    %11 = vector.broadcast %cst_15 : f32 to vector<8x32xf32>
    %c0_i32 = arith.constant 0 : i32
    %12 = arith.index_cast %c0_i32 : i32 to index
    %c0_16 = arith.constant 0 : index
    %c0_17 = arith.constant 0 : index
    %13 = vector.load %arg8[%12, %c0_16, %c0_17] : memref<8x8x32xf32, #tpu.memory_space<vmem>>, vector<1x8x32xf32>
    %14 = vector.shape_cast %13 : vector<1x8x32xf32> to vector<8x32xf32>
    %cst_18 = arith.constant dense<0.000000e+00> : vector<8x32xf32>
    %15 = tpu.matmul %11, %8, %cst_18 {dimension_numbers = #tpu.dot_dimension_numbers<[1], [0], [0], [1], [0, 0, 1, 1], [], []>} : vector<8x32xf32>, vector<32x32xf32>, vector<8x32xf32> -> vector<8x32xf32>
    %16 = arith.addf %14, %15 : vector<8x32xf32>
    %17 = math.tanh %16 : vector<8x32xf32>
    %cst_19 = arith.constant dense<0.000000e+00> : vector<8x128xf32>
    %18 = tpu.matmul %17, %9, %cst_19 {dimension_numbers = #tpu.dot_dimension_numbers<[1], [0], [0], [1], [0, 0, 1, 1], [], []>} : vector<8x32xf32>, vector<32x128xf32>, vector<8x128xf32> -> vector<8x128xf32>
    %19 = vector.broadcast %10 : vector<1x128xf32> to vector<8x128xf32>
    %20 = arith.addf %18, %19 : vector<8x128xf32>
    %21 = arith.index_cast %c0_i32 : i32 to index
    %c0_20 = arith.constant 0 : index
    %c0_21 = arith.constant 0 : index
    %22 = vector.load %arg7[%21, %c0_20, %c0_21] : memref<8x8x128xf32, #tpu.memory_space<vmem>>, vector<1x8x128xf32>
    %23 = vector.shape_cast %22 : vector<1x8x128xf32> to vector<8x128xf32>
    %24 = vector.shape_cast %20 : vector<8x128xf32> to vector<1x8x128xf32>
    tpu.vector_store %arg7[%21, %c0_20, %c0_21], %24 {strides = array<i32>} : memref<8x8x128xf32, #tpu.memory_space<vmem>>, vector<1x8x128xf32>,
    %c1_i32 = arith.constant 1 : i32
    %25 = arith.index_cast %c1_i32 : i32 to index
    %c0_22 = arith.constant 0 : index
    %c0_23 = arith.constant 0 : index
    %26 = vector.load %arg8[%25, %c0_22, %c0_23] : memref<8x8x32xf32, #tpu.memory_space<vmem>>, vector<1x8x32xf32>
    %27 = vector.shape_cast %26 : vector<1x8x32xf32> to vector<8x32xf32>
    %cst_24 = arith.constant dense<0.000000e+00> : vector<8x32xf32>
    %28 = tpu.matmul %17, %8, %cst_24 {dimension_numbers = #tpu.dot_dimension_numbers<[1], [0], [0], [1], [0, 0, 1, 1], [], []>} : vector<8x32xf32>, vector<32x32xf32>, vector<8x32xf32> -> vector<8x32xf32>
    %29 = arith.addf %27, %28 : vector<8x32xf32>
    %30 = math.tanh %29 : vector<8x32xf32>
    %cst_25 = arith.constant dense<0.000000e+00> : vector<8x128xf32>
    %31 = tpu.matmul %30, %9, %cst_25 {dimension_numbers = #tpu.dot_dimension_numbers<[1], [0], [0], [1], [0, 0, 1, 1], [], []>} : vector<8x32xf32>, vector<32x128xf32>, vector<8x128xf32> -> vector<8x128xf32>
    %32 = vector.broadcast %10 : vector<1x128xf32> to vector<8x128xf32>
    %33 = arith.addf %31, %32 : vector<8x128xf32>
    %34 = arith.index_cast %c1_i32 : i32 to index
    %c0_26 = arith.constant 0 : index
    %c0_27 = arith.constant 0 : index
    %35 = vector.load %arg7[%34, %c0_26, %c0_27] : memref<8x8x128xf32, #tpu.memory_space<vmem>>, vector<1x8x128xf32>
    %36 = vector.shape_cast %35 : vector<1x8x128xf32> to vector<8x128xf32>
    %37 = vector.shape_cast %33 : vector<8x128xf32> to vector<1x8x128xf32>
    tpu.vector_store %arg7[%34, %c0_26, %c0_27], %37 {strides = array<i32>} : memref<8x8x128xf32, #tpu.memory_space<vmem>>, vector<1x8x128xf32>,
    %c2_i32 = arith.constant 2 : i32
    %38 = arith.index_cast %c2_i32 : i32 to index
    %c0_28 = arith.constant 0 : index
    %c0_29 = arith.constant 0 : index
    %39 = vector.load %arg8[%38, %c0_28, %c0_29] : memref<8x8x32xf32, #tpu.memory_space<vmem>>, vector<1x8x32xf32>
    %40 = vector.shape_cast %39 : vector<1x8x32xf32> to vector<8x32xf32>
    %cst_30 = arith.constant dense<0.000000e+00> : vector<8x32xf32>
    %41 = tpu.matmul %30, %8, %cst_30 {dimension_numbers = #tpu.dot_dimension_numbers<[1], [0], [0], [1], [0, 0, 1, 1], [], []>} : vector<8x32xf32>, vector<32x32xf32>, vector<8x32xf32> -> vector<8x32xf32>
    %42 = arith.addf %40, %41 : vector<8x32xf32>
    %43 = math.tanh %42 : vector<8x32xf32>
    %cst_31 = arith.constant dense<0.000000e+00> : vector<8x128xf32>
    %44 = tpu.matmul %43, %9, %cst_31 {dimension_numbers = #tpu.dot_dimension_numbers<[1], [0], [0], [1], [0, 0, 1, 1], [], []>} : vector<8x32xf32>, vector<32x128xf32>, vector<8x128xf32> -> vector<8x128xf32>
    %45 = vector.broadcast %10 : vector<1x128xf32> to vector<8x128xf32>
    %46 = arith.addf %44, %45 : vector<8x128xf32>
    %47 = arith.index_cast %c2_i32 : i32 to index
    %c0_32 = arith.constant 0 : index
    %c0_33 = arith.constant 0 : index
    %48 = vector.load %arg7[%47, %c0_32, %c0_33] : memref<8x8x128xf32, #tpu.memory_space<vmem>>, vector<1x8x128xf32>
    %49 = vector.shape_cast %48 : vector<1x8x128xf32> to vector<8x128xf32>
    %50 = vector.shape_cast %46 : vector<8x128xf32> to vector<1x8x128xf32>
    tpu.vector_store %arg7[%47, %c0_32, %c0_33], %50 {strides = array<i32>} : memref<8x8x128xf32, #tpu.memory_space<vmem>>, vector<1x8x128xf32>,
    %c3_i32 = arith.constant 3 : i32
    %51 = arith.index_cast %c3_i32 : i32 to index
    %c0_34 = arith.constant 0 : index
    %c0_35 = arith.constant 0 : index
    %52 = vector.load %arg8[%51, %c0_34, %c0_35] : memref<8x8x32xf32, #tpu.memory_space<vmem>>, vector<1x8x32xf32>
    %53 = vector.shape_cast %52 : vector<1x8x32xf32> to vector<8x32xf32>
    %cst_36 = arith.constant dense<0.000000e+00> : vector<8x32xf32>
    %54 = tpu.matmul %43, %8, %cst_36 {dimension_numbers = #tpu.dot_dimension_numbers<[1], [0], [0], [1], [0, 0, 1, 1], [], []>} : vector<8x32xf32>, vector<32x32xf32>, vector<8x32xf32> -> vector<8x32xf32>
    %55 = arith.addf %53, %54 : vector<8x32xf32>
    %56 = math.tanh %55 : vector<8x32xf32>
    %cst_37 = arith.constant dense<0.000000e+00> : vector<8x128xf32>
    %57 = tpu.matmul %56, %9, %cst_37 {dimension_numbers = #tpu.dot_dimension_numbers<[1], [0], [0], [1], [0, 0, 1, 1], [], []>} : vector<8x32xf32>, vector<32x128xf32>, vector<8x128xf32> -> vector<8x128xf32>
    %58 = vector.broadcast %10 : vector<1x128xf32> to vector<8x128xf32>
    %59 = arith.addf %57, %58 : vector<8x128xf32>
    %60 = arith.index_cast %c3_i32 : i32 to index
    %c0_38 = arith.constant 0 : index
    %c0_39 = arith.constant 0 : index
    %61 = vector.load %arg7[%60, %c0_38, %c0_39] : memref<8x8x128xf32, #tpu.memory_space<vmem>>, vector<1x8x128xf32>
    %62 = vector.shape_cast %61 : vector<1x8x128xf32> to vector<8x128xf32>
    %63 = vector.shape_cast %59 : vector<8x128xf32> to vector<1x8x128xf32>
    tpu.vector_store %arg7[%60, %c0_38, %c0_39], %63 {strides = array<i32>} : memref<8x8x128xf32, #tpu.memory_space<vmem>>, vector<1x8x128xf32>,
    %c4_i32 = arith.constant 4 : i32
    %64 = arith.index_cast %c4_i32 : i32 to index
    %c0_40 = arith.constant 0 : index
    %c0_41 = arith.constant 0 : index
    %65 = vector.load %arg8[%64, %c0_40, %c0_41] : memref<8x8x32xf32, #tpu.memory_space<vmem>>, vector<1x8x32xf32>
    %66 = vector.shape_cast %65 : vector<1x8x32xf32> to vector<8x32xf32>
    %cst_42 = arith.constant dense<0.000000e+00> : vector<8x32xf32>
    %67 = tpu.matmul %56, %8, %cst_42 {dimension_numbers = #tpu.dot_dimension_numbers<[1], [0], [0], [1], [0, 0, 1, 1], [], []>} : vector<8x32xf32>, vector<32x32xf32>, vector<8x32xf32> -> vector<8x32xf32>
    %68 = arith.addf %66, %67 : vector<8x32xf32>
    %69 = math.tanh %68 : vector<8x32xf32>
    %cst_43 = arith.constant dense<0.000000e+00> : vector<8x128xf32>
    %70 = tpu.matmul %69, %9, %cst_43 {dimension_numbers = #tpu.dot_dimension_numbers<[1], [0], [0], [1], [0, 0, 1, 1], [], []>} : vector<8x32xf32>, vector<32x128xf32>, vector<8x128xf32> -> vector<8x128xf32>
    %71 = vector.broadcast %10 : vector<1x128xf32> to vector<8x128xf32>
    %72 = arith.addf %70, %71 : vector<8x128xf32>
    %73 = arith.index_cast %c4_i32 : i32 to index
    %c0_44 = arith.constant 0 : index
    %c0_45 = arith.constant 0 : index
    %74 = vector.load %arg7[%73, %c0_44, %c0_45] : memref<8x8x128xf32, #tpu.memory_space<vmem>>, vector<1x8x128xf32>
    %75 = vector.shape_cast %74 : vector<1x8x128xf32> to vector<8x128xf32>
    %76 = vector.shape_cast %72 : vector<8x128xf32> to vector<1x8x128xf32>
    tpu.vector_store %arg7[%73, %c0_44, %c0_45], %76 {strides = array<i32>} : memref<8x8x128xf32, #tpu.memory_space<vmem>>, vector<1x8x128xf32>,
    %c5_i32 = arith.constant 5 : i32
    %77 = arith.index_cast %c5_i32 : i32 to index
    %c0_46 = arith.constant 0 : index
    %c0_47 = arith.constant 0 : index
    %78 = vector.load %arg8[%77, %c0_46, %c0_47] : memref<8x8x32xf32, #tpu.memory_space<vmem>>, vector<1x8x32xf32>
    %79 = vector.shape_cast %78 : vector<1x8x32xf32> to vector<8x32xf32>
    %cst_48 = arith.constant dense<0.000000e+00> : vector<8x32xf32>
    %80 = tpu.matmul %69, %8, %cst_48 {dimension_numbers = #tpu.dot_dimension_numbers<[1], [0], [0], [1], [0, 0, 1, 1], [], []>} : vector<8x32xf32>, vector<32x32xf32>, vector<8x32xf32> -> vector<8x32xf32>
    %81 = arith.addf %79, %80 : vector<8x32xf32>
    %82 = math.tanh %81 : vector<8x32xf32>
    %cst_49 = arith.constant dense<0.000000e+00> : vector<8x128xf32>
    %83 = tpu.matmul %82, %9, %cst_49 {dimension_numbers = #tpu.dot_dimension_numbers<[1], [0], [0], [1], [0, 0, 1, 1], [], []>} : vector<8x32xf32>, vector<32x128xf32>, vector<8x128xf32> -> vector<8x128xf32>
    %84 = vector.broadcast %10 : vector<1x128xf32> to vector<8x128xf32>
    %85 = arith.addf %83, %84 : vector<8x128xf32>
    %86 = arith.index_cast %c5_i32 : i32 to index
    %c0_50 = arith.constant 0 : index
    %c0_51 = arith.constant 0 : index
    %87 = vector.load %arg7[%86, %c0_50, %c0_51] : memref<8x8x128xf32, #tpu.memory_space<vmem>>, vector<1x8x128xf32>
    %88 = vector.shape_cast %87 : vector<1x8x128xf32> to vector<8x128xf32>
    %89 = vector.shape_cast %85 : vector<8x128xf32> to vector<1x8x128xf32>
    tpu.vector_store %arg7[%86, %c0_50, %c0_51], %89 {strides = array<i32>} : memref<8x8x128xf32, #tpu.memory_space<vmem>>, vector<1x8x128xf32>,
    %c6_i32 = arith.constant 6 : i32
    %90 = arith.index_cast %c6_i32 : i32 to index
    %c0_52 = arith.constant 0 : index
    %c0_53 = arith.constant 0 : index
    %91 = vector.load %arg8[%90, %c0_52, %c0_53] : memref<8x8x32xf32, #tpu.memory_space<vmem>>, vector<1x8x32xf32>
    %92 = vector.shape_cast %91 : vector<1x8x32xf32> to vector<8x32xf32>
    %cst_54 = arith.constant dense<0.000000e+00> : vector<8x32xf32>
    %93 = tpu.matmul %82, %8, %cst_54 {dimension_numbers = #tpu.dot_dimension_numbers<[1], [0], [0], [1], [0, 0, 1, 1], [], []>} : vector<8x32xf32>, vector<32x32xf32>, vector<8x32xf32> -> vector<8x32xf32>
    %94 = arith.addf %92, %93 : vector<8x32xf32>
    %95 = math.tanh %94 : vector<8x32xf32>
    %cst_55 = arith.constant dense<0.000000e+00> : vector<8x128xf32>
    %96 = tpu.matmul %95, %9, %cst_55 {dimension_numbers = #tpu.dot_dimension_numbers<[1], [0], [0], [1], [0, 0, 1, 1], [], []>} : vector<8x32xf32>, vector<32x128xf32>, vector<8x128xf32> -> vector<8x128xf32>
    %97 = vector.broadcast %10 : vector<1x128xf32> to vector<8x128xf32>
    %98 = arith.addf %96, %97 : vector<8x128xf32>
    %99 = arith.index_cast %c6_i32 : i32 to index
    %c0_56 = arith.constant 0 : index
    %c0_57 = arith.constant 0 : index
    %100 = vector.load %arg7[%99, %c0_56, %c0_57] : memref<8x8x128xf32, #tpu.memory_space<vmem>>, vector<1x8x128xf32>
    %101 = vector.shape_cast %100 : vector<1x8x128xf32> to vector<8x128xf32>
    %102 = vector.shape_cast %98 : vector<8x128xf32> to vector<1x8x128xf32>
    tpu.vector_store %arg7[%99, %c0_56, %c0_57], %102 {strides = array<i32>} : memref<8x8x128xf32, #tpu.memory_space<vmem>>, vector<1x8x128xf32>,
    %c7_i32 = arith.constant 7 : i32
    %103 = arith.index_cast %c7_i32 : i32 to index
    %c0_58 = arith.constant 0 : index
    %c0_59 = arith.constant 0 : index
    %104 = vector.load %arg8[%103, %c0_58, %c0_59] : memref<8x8x32xf32, #tpu.memory_space<vmem>>, vector<1x8x32xf32>
    %105 = vector.shape_cast %104 : vector<1x8x32xf32> to vector<8x32xf32>
    %cst_60 = arith.constant dense<0.000000e+00> : vector<8x32xf32>
    %106 = tpu.matmul %95, %8, %cst_60 {dimension_numbers = #tpu.dot_dimension_numbers<[1], [0], [0], [1], [0, 0, 1, 1], [], []>} : vector<8x32xf32>, vector<32x32xf32>, vector<8x32xf32> -> vector<8x32xf32>
    %107 = arith.addf %105, %106 : vector<8x32xf32>
    %108 = math.tanh %107 : vector<8x32xf32>
    %cst_61 = arith.constant dense<0.000000e+00> : vector<8x128xf32>
    %109 = tpu.matmul %108, %9, %cst_61 {dimension_numbers = #tpu.dot_dimension_numbers<[1], [0], [0], [1], [0, 0, 1, 1], [], []>} : vector<8x32xf32>, vector<32x128xf32>, vector<8x128xf32> -> vector<8x128xf32>
    %110 = vector.broadcast %10 : vector<1x128xf32> to vector<8x128xf32>
    %111 = arith.addf %109, %110 : vector<8x128xf32>
    %112 = arith.index_cast %c7_i32 : i32 to index
    %c0_62 = arith.constant 0 : index
    %c0_63 = arith.constant 0 : index
    %113 = vector.load %arg7[%112, %c0_62, %c0_63] : memref<8x8x128xf32, #tpu.memory_space<vmem>>, vector<1x8x128xf32>
    %114 = vector.shape_cast %113 : vector<1x8x128xf32> to vector<8x128xf32>
    %115 = vector.shape_cast %111 : vector<8x128xf32> to vector<1x8x128xf32>
    tpu.vector_store %arg7[%112, %c0_62, %c0_63], %115 {strides = array<i32>} : memref<8x8x128xf32, #tpu.memory_space<vmem>>, vector<1x8x128xf32>,
    %c8_i32 = arith.constant 8 : i32
    return
  }
  func.func @transform_0(%arg0: i32) -> (i32, i32, i32) {
    %c0_i32 = arith.constant 0 : i32
    %c0_i32_0 = arith.constant 0 : i32
    %c0_i32_1 = arith.constant 0 : i32
    return %c0_i32, %arg0, %c0_i32_0 : i32, i32, i32
  }
  func.func @transform_1(%arg0: i32) -> (i32, i32) {
    %c0_i32 = arith.constant 0 : i32
    %c0_i32_0 = arith.constant 0 : i32
    %c0_i32_1 = arith.constant 0 : i32
    return %c0_i32, %c0_i32_0 : i32, i32
  }
  func.func @transform_2(%arg0: i32) -> (i32, i32) {
    %c0_i32 = arith.constant 0 : i32
    %c0_i32_0 = arith.constant 0 : i32
    %c0_i32_1 = arith.constant 0 : i32
    return %c0_i32, %c0_i32_0 : i32, i32
  }
  func.func @transform_3(%arg0: i32) -> (i32, i32) {
    %c0_i32 = arith.constant 0 : i32
    %c0_i32_0 = arith.constant 0 : i32
    %c0_i32_1 = arith.constant 0 : i32
    return %c0_i32, %c0_i32_0 : i32, i32
  }
  func.func @transform_4(%arg0: i32) -> (i32, i32) {
    %c0_i32 = arith.constant 0 : i32
    %c0_i32_0 = arith.constant 0 : i32
    %c0_i32_1 = arith.constant 0 : i32
    return %c0_i32, %c0_i32_0 : i32, i32
  }
  func.func @transform_5(%arg0: i32) -> (i32, i32) {
    %c0_i32 = arith.constant 0 : i32
    %c0_i32_0 = arith.constant 0 : i32
    %c0_i32_1 = arith.constant 0 : i32
    return %c0_i32, %c0_i32_0 : i32, i32
  }
  func.func @transform_6(%arg0: i32) -> (i32, i32, i32) {
    %c0_i32 = arith.constant 0 : i32
    %c0_i32_0 = arith.constant 0 : i32
    %c0_i32_1 = arith.constant 0 : i32
    return %c0_i32, %arg0, %c0_i32_0 : i32, i32, i32
  }
}

</mosaic_0001>

<llo_original>
// kernel: tpu_custom_call.1
$region0: #{tpu_custom_call.1}
  #allocation0 [shape = 'u32[]', space=smem, size = 0x4, offset = 0x4, fixed_abs, tag = 'smem constant byte address 0x4 - core index']
  #allocation1 [shape = 'u32[72,128]{1,0:T(1,128)}', space=vmem, size = 0x9000, scoped, tag = 'internal scratch']
  #allocation2 [shape = 'f32[8,8,32]{2,1,0:T(8,128)}', space=vmem, size = 0x8000, scoped, tag = 'scratch operand']
  %s0 = inlined_call_operand.hbm [shape: f32[8,8,16], index: 0, kind: input, shape index: {}]
  %s1 = inlined_call_operand.hbm [shape: f32[16,32], index: 1, kind: input, shape index: {}]
  %s2 = inlined_call_operand.hbm [shape: f32[32,32], index: 2, kind: input, shape index: {}]
  %s3 = inlined_call_operand.vmem [shape: f32[1,32], index: 3, kind: input, shape index: {}]
  %s4 = inlined_call_operand.hbm [shape: f32[32,128], index: 4, kind: input, shape index: {}]
  %s5 = inlined_call_operand.vmem [shape: f32[1,128], index: 5, kind: input, shape index: {}]
  %s6 = inlined_call_operand.hbm [shape: f32[8,8,128], index: 6, kind: output, shape index: {}]
  %s7 = sld [smem:[#allocation0]]
  $region50: #{tpu_custom_call.1} parent=0
    _
  %s9 = ssub.s32 1, %s7
  %s10 = scalar_select 0, %s9, %s7
  $region1: #{tpu_custom_call.1} parent=0
    #allocation3 [shape = 'u8[32768]{0}', space=vmem, size = 0x8000, scoped, tag = 'input window, operand 0, single buffered']
    #allocation4 [shape = 's32[1]{0}', space=sflag, size = 0x4, scoped, tag = 'scoped memory for tpu_custom_call.1']
    #allocation5 [shape = 's32[1]{0}', space=sflag, size = 0x4, scoped, tag = 'scoped memory for tpu_custom_call.1']
    #allocation6 [shape = 'u8[8192]{0}', space=vmem, size = 0x2000, scoped, tag = 'input window, operand 1, single buffered']
    #allocation7 [shape = 's32[1]{0}', space=sflag, size = 0x4, scoped, tag = 'scoped memory for tpu_custom_call.1']
    #allocation8 [shape = 'u8[16384]{0}', space=vmem, size = 0x4000, scoped, tag = 'input window, operand 2, single buffered']
    #allocation9 [shape = 'u8[16384]{0}', space=vmem, size = 0x4000, scoped, tag = 'input window, operand 4, single buffered']
    #allocation10 [shape = 's32[1]{0}', space=sflag, size = 0x4, scoped, tag = 'scoped memory for tpu_custom_call.1']
    #allocation11 [shape = 'u8[32768]{0}', space=vmem, size = 0x8000, scoped, tag = 'output window, operand 0, single buffered']
    %11 = vsyncpa [#allocation4], 0
    %12 = vsyncpa [#allocation7], 0
    %13 = vsyncpa [#allocation10], 0
    %14 = vsyncpa [#allocation5], 0
    // Predicated region
    $region2: #{tpu_custom_call.1} parent=1 // pred_check
      _
    $region3: #{tpu_custom_call.1} parent=1 // pred_check_branch
      %16 = sbr.rel (0) target = $region5
    $region4: #{tpu_custom_call.1} parent=1 // pred_region
      %18 = vsyncadd [#allocation4], 0
      %s19 = sshll.u32 %s0, 4
      %s20 = int_to_ptr.hbm [resolvable:$true] %s19
      %s21 = sshll.u32 [#allocation3], 4
      %s22 = int_to_ptr.vmem [resolvable:$true] %s21
      %27 = dma.hbm_to_vmem [thread:$0]  %s20, 1024, %s22, [#allocation4], 128, 128, 8
    $region5: #{tpu_custom_call.1} parent=1 // pred_fallthru
      _
    // Predicated region
    $region6: #{tpu_custom_call.1} parent=1 // pred_check
      _
    $region7: #{tpu_custom_call.1} parent=1 // pred_check_branch
      %29 = sbr.rel (0) target = $region9
    $region8: #{tpu_custom_call.1} parent=1 // pred_region
      %31 = vsyncadd [#allocation7], 0
      %s32 = sshll.u32 %s1, 4
      %s33 = int_to_ptr.hbm [resolvable:$true] %s32
      %s34 = sshll.u32 [#allocation6], 4
      %s35 = int_to_ptr.vmem [resolvable:$true] %s34
      %40 = dma.hbm_to_vmem [thread:$0]  %s33, 256, %s35, [#allocation7], 128, 128, 8
    $region9: #{tpu_custom_call.1} parent=1 // pred_fallthru
      _
    // Predicated region
    $region10: #{tpu_custom_call.1} parent=1 // pred_check
      _
    $region11: #{tpu_custom_call.1} parent=1 // pred_check_branch
      %42 = sbr.rel (0) target = $region13
    $region12: #{tpu_custom_call.1} parent=1 // pred_region
      %44 = vsyncadd [#allocation7], 0
      %s45 = sshll.u32 %s2, 4
      %s46 = int_to_ptr.hbm [resolvable:$true] %s45
      %s47 = sshll.u32 [#allocation8], 4
      %s48 = int_to_ptr.vmem [resolvable:$true] %s47
      %53 = dma.hbm_to_vmem [thread:$0]  %s46, 512, %s48, [#allocation7], 128, 128, 8
    $region13: #{tpu_custom_call.1} parent=1 // pred_fallthru
      _
    // Predicated region
    $region14: #{tpu_custom_call.1} parent=1 // pred_check
      _
    $region15: #{tpu_custom_call.1} parent=1 // pred_check_branch
      %55 = sbr.rel (0) target = $region17
    $region16: #{tpu_custom_call.1} parent=1 // pred_region
      _
    $region17: #{tpu_custom_call.1} parent=1 // pred_fallthru
      _
    // Predicated region
    $region18: #{tpu_custom_call.1} parent=1 // pred_check
      _
    $region19: #{tpu_custom_call.1} parent=1 // pred_check_branch
      %57 = sbr.rel (0) target = $region21
    $region20: #{tpu_custom_call.1} parent=1 // pred_region
      %59 = vsyncadd [#allocation10], 0
      %s60 = sshll.u32 %s4, 4
      %s61 = int_to_ptr.hbm [resolvable:$true] %s60
      %s62 = sshll.u32 [#allocation9], 4
      %s63 = int_to_ptr.vmem [resolvable:$true] %s62
      %68 = dma.hbm_to_vmem [thread:$0]  %s61, 512, %s63, [#allocation10], 128, 128, 8
    $region21: #{tpu_custom_call.1} parent=1 // pred_fallthru
      _
    // Predicated region
    $region22: #{tpu_custom_call.1} parent=1 // pred_check
      _
    $region23: #{tpu_custom_call.1} parent=1 // pred_check_branch
      %70 = sbr.rel (0) target = $region25
    $region24: #{tpu_custom_call.1} parent=1 // pred_region
      _
    $region25: #{tpu_custom_call.1} parent=1 // pred_fallthru
      _
    // Predicated region
    $region26: #{tpu_custom_call.1} parent=1 // pred_check
      _
    $region27: #{tpu_custom_call.1} parent=1 // pred_check_branch
      %72 = sbr.rel (0) target = $region29
    $region28: #{tpu_custom_call.1} parent=1 // pred_region
      %74 = dma.done [#allocation4], 1024
    $region29: #{tpu_custom_call.1} parent=1 // pred_fallthru
      _
    // Predicated region
    $region30: #{tpu_custom_call.1} parent=1 // pred_check
      _
    $region31: #{tpu_custom_call.1} parent=1 // pred_check_branch
      %76 = sbr.rel (0) target = $region33
    $region32: #{tpu_custom_call.1} parent=1 // pred_region
      %78 = dma.done [#allocation7], 256
    $region33: #{tpu_custom_call.1} parent=1 // pred_fallthru
      _
    // Predicated region
    $region34: #{tpu_custom_call.1} parent=1 // pred_check
      _
    $region35: #{tpu_custom_call.1} parent=1 // pred_check_branch
      %80 = sbr.rel (0) target = $region37
    $region36: #{tpu_custom_call.1} parent=1 // pred_region
      %82 = dma.done [#allocation7], 512
    $region37: #{tpu_custom_call.1} parent=1 // pred_fallthru
      _
    // Predicated region
    $region38: #{tpu_custom_call.1} parent=1 // pred_check
      _
    $region39: #{tpu_custom_call.1} parent=1 // pred_check_branch
      %84 = sbr.rel (0) target = $region41
    $region40: #{tpu_custom_call.1} parent=1 // pred_region
      %86 = dma.done [#allocation10], 512
    $region41: #{tpu_custom_call.1} parent=1 // pred_fallthru
      _
    %v87 = vld [vmem:[#allocation3] sm:$0xff]
    %v88 = vld [vmem:[#allocation3 + $0x8] sm:$0xff]
    %v89 = vld [vmem:[#allocation3 + $0x10] sm:$0xff]
    %v90 = vld [vmem:[#allocation3 + $0x18] sm:$0xff]
    %v91 = vld [vmem:[#allocation3 + $0x20] sm:$0xff]
    %v92 = vld [vmem:[#allocation3 + $0x28] sm:$0xff]
    %v93 = vld [vmem:[#allocation3 + $0x30] sm:$0xff]
    %v94 = vld [vmem:[#allocation3 + $0x38] sm:$0xff]
    %v95 = vld [vmem:[#allocation6] sm:$0xff]
    %v96 = vld [vmem:[#allocation6 + $0x8] sm:$0xff]
    %v97 = vld [vmem:[%s3] sm:$0x1]
    %v99 = vperm.slane %v97, 0
    %vm101 = vcmask 130048
    %v103 = vsel %vm101, %v87, 0
    %v106 = vsel %vm101, %v88, 0
    %v109 = vsel %vm101, %v89, 0
    %v112 = vsel %vm101, %v90, 0
    %v115 = vsel %vm101, %v91, 0
    %v118 = vsel %vm101, %v92, 0
    %v121 = vsel %vm101, %v93, 0
    %v124 = vsel %vm101, %v94, 0
    %126 = vmatpush.msra.mxu0 0.0
    %127 = vmatpush.msra.mxu0 0.0
    %128 = vmatpush.msra.mxu0 0.0
    %129 = vmatpush.msra.mxu0 0.0
    %130 = vmatpush.msra.mxu0 0.0
    %131 = vmatpush.msra.mxu0 0.0
    %132 = vmatpush.msra.mxu0 0.0
    %133 = vmatpush.msra.mxu0 0.0
    %134 = vmatpush.msra.mxu0 0.0
    %135 = vmatpush.msra.mxu0 0.0
    %136 = vmatpush.msra.mxu0 0.0
    %137 = vmatpush.msra.mxu0 0.0
    %138 = vmatpush.msra.mxu0 0.0
    %139 = vmatpush.msra.mxu0 0.0
    %140 = vmatpush.msra.mxu0 %v96
    %141 = vmatpush.msra.mxu0 %v95
    %142 = vmatmul.f32.gmra.mxu0 %v103
    %v143 = vpop.f32.mrf.mxu0
    %v144 = vadd.f32 %v99, %v143
    %145 = vmatmul.f32.gmra.mxu0 %v106
    %v146 = vpop.f32.mrf.mxu0
    %v147 = vadd.f32 %v99, %v146
    %148 = vmatmul.f32.gmra.mxu0 %v109
    %v149 = vpop.f32.mrf.mxu0
    %v150 = vadd.f32 %v99, %v149
    %151 = vmatmul.f32.gmra.mxu0 %v112
    %v152 = vpop.f32.mrf.mxu0
    %v153 = vadd.f32 %v99, %v152
    %154 = vmatmul.f32.gmra.mxu0 %v115
    %v155 = vpop.f32.mrf.mxu0
    %v156 = vadd.f32 %v99, %v155
    %157 = vmatmul.f32.gmra.mxu0 %v118
    %v158 = vpop.f32.mrf.mxu0
    %v159 = vadd.f32 %v99, %v158
    %160 = vmatmul.f32.gmra.mxu0 %v121
    %v161 = vpop.f32.mrf.mxu0
    %v162 = vadd.f32 %v99, %v161
    %163 = vmatmul.f32.gmra.mxu0 %v124
    %v164 = vpop.f32.mrf.mxu0
    %v165 = vadd.f32 %v99, %v164
    %166 = vdwg.mxu0
    %vm167 = vcmask 261120
    %168 = vst.msk [vmem:[#allocation2] sm:$0xff] %vm167, %v144
    %169 = vst.msk [vmem:[#allocation2 + $0x8] sm:$0xff] %vm167, %v147
    %170 = vst.msk [vmem:[#allocation2 + $0x10] sm:$0xff] %vm167, %v150
    %171 = vst.msk [vmem:[#allocation2 + $0x18] sm:$0xff] %vm167, %v153
    %172 = vst.msk [vmem:[#allocation2 + $0x20] sm:$0xff] %vm167, %v156
    %173 = vst.msk [vmem:[#allocation2 + $0x28] sm:$0xff] %vm167, %v159
    %174 = vst.msk [vmem:[#allocation2 + $0x30] sm:$0xff] %vm167, %v162
    %175 = vst.msk [vmem:[#allocation2 + $0x38] sm:$0xff] %vm167, %v165
    %v176 = vld [vmem:[#allocation8] sm:$0xff]
    %v177 = vld [vmem:[#allocation8 + $0x8] sm:$0xff]
    %v178 = vld [vmem:[#allocation8 + $0x10] sm:$0xff]
    %v179 = vld [vmem:[#allocation8 + $0x18] sm:$0xff]
    %v180 = vld [vmem:[#allocation9] sm:$0xff]
    %v181 = vld [vmem:[#allocation9 + $0x8] sm:$0xff]
    %v182 = vld [vmem:[#allocation9 + $0x10] sm:$0xff]
    %v183 = vld [vmem:[#allocation9 + $0x18] sm:$0xff]
    %v184 = vld [vmem:[%s5] sm:$0x1]
    %v185 = vld [vmem:[#allocation2] sm:$0xff]
    %v187 = vsel %vm167, 0.0, 0
    %189 = vmatpush.msra.mxu0 0.0
    %190 = vmatpush.msra.mxu0 0.0
    %191 = vmatpush.msra.mxu0 0.0
    %192 = vmatpush.msra.mxu0 0.0
    %193 = vmatpush.msra.mxu0 0.0
    %194 = vmatpush.msra.mxu0 0.0
    %195 = vmatpush.msra.mxu0 0.0
    %196 = vmatpush.msra.mxu0 0.0
    %197 = vmatpush.msra.mxu0 0.0
    %198 = vmatpush.msra.mxu0 0.0
    %199 = vmatpush.msra.mxu0 0.0
    %200 = vmatpush.msra.mxu0 0.0
    %201 = vmatpush.msra.mxu0 %v179
    %202 = vmatpush.msra.mxu0 %v178
    %203 = vmatpush.msra.mxu0 %v177
    %204 = vmatpush.msra.mxu0 %v176
    %205 = vmatmul.f32.gmra.mxu0 %v187
    %v206 = vpop.f32.mrf.mxu0
    %v207 = vadd.f32 0.0, %v206
    %208 = vdwg.mxu0
    %v209 = vadd.f32 %v185, %v207
    %v210 = vtanh.pop %v209
    %v212 = vperm.slane %v184, 0
    %v215 = vsel %vm167, %v210, 0
    %217 = vmatpush.msra.mxu0 0.0
    %218 = vmatpush.msra.mxu0 0.0
    %219 = vmatpush.msra.mxu0 0.0
    %220 = vmatpush.msra.mxu0 0.0
    %221 = vmatpush.msra.mxu0 0.0
    %222 = vmatpush.msra.mxu0 0.0
    %223 = vmatpush.msra.mxu0 0.0
    %224 = vmatpush.msra.mxu0 0.0
    %225 = vmatpush.msra.mxu0 0.0
    %226 = vmatpush.msra.mxu0 0.0
    %227 = vmatpush.msra.mxu0 0.0
    %228 = vmatpush.msra.mxu0 0.0
    %229 = vmatpush.msra.mxu0 %v183
    %230 = vmatpush.msra.mxu0 %v182
    %231 = vmatpush.msra.mxu0 %v181
    %232 = vmatpush.msra.mxu0 %v180
    %233 = vmatmul.f32.gmra.mxu0 %v215
    %v234 = vpop.f32.mrf.mxu0
    %v235 = vadd.f32 %v212, %v234
    %236 = vdwg.mxu0
    %237 = vst [vmem:[#allocation11] sm:$0xff] %v235
    %s238 = scalar_lea.vmem [#allocation2], 8
    %v239 = vld [vmem:[%s238] sm:$0xff]
    %240 = vmatpush.msra.mxu0 0.0
    %241 = vmatpush.msra.mxu0 0.0
    %242 = vmatpush.msra.mxu0 0.0
    %243 = vmatpush.msra.mxu0 0.0
    %244 = vmatpush.msra.mxu0 0.0
    %245 = vmatpush.msra.mxu0 0.0
    %246 = vmatpush.msra.mxu0 0.0
    %247 = vmatpush.msra.mxu0 0.0
    %248 = vmatpush.msra.mxu0 0.0
    %249 = vmatpush.msra.mxu0 0.0
    %250 = vmatpush.msra.mxu0 0.0
    %251 = vmatpush.msra.mxu0 0.0
    %252 = vmatpush.msra.mxu0 %v179
    %253 = vmatpush.msra.mxu0 %v178
    %254 = vmatpush.msra.mxu0 %v177
    %255 = vmatpush.msra.mxu0 %v176
    %256 = vmatmul.f32.gmra.mxu0 %v215
    %v257 = vpop.f32.mrf.mxu0
    %v258 = vadd.f32 0.0, %v257
    %259 = vdwg.mxu0
    %v260 = vadd.f32 %v239, %v258
    %v261 = vtanh.pop %v260
    %v263 = vsel %vm167, %v261, 0
    %265 = vmatpush.msra.mxu0 0.0
    %266 = vmatpush.msra.mxu0 0.0
    %267 = vmatpush.msra.mxu0 0.0
    %268 = vmatpush.msra.mxu0 0.0
    %269 = vmatpush.msra.mxu0 0.0
    %270 = vmatpush.msra.mxu0 0.0
    %271 = vmatpush.msra.mxu0 0.0
    %272 = vmatpush.msra.mxu0 0.0
    %273 = vmatpush.msra.mxu0 0.0
    %274 = vmatpush.msra.mxu0 0.0
    %275 = vmatpush.msra.mxu0 0.0
    %276 = vmatpush.msra.mxu0 0.0
    %277 = vmatpush.msra.mxu0 %v183
    %278 = vmatpush.msra.mxu0 %v182
    %279 = vmatpush.msra.mxu0 %v181
    %280 = vmatpush.msra.mxu0 %v180
    %281 = vmatmul.f32.gmra.mxu0 %v263
    %v282 = vpop.f32.mrf.mxu0
    %v283 = vadd.f32 %v212, %v282
    %284 = vdwg.mxu0
    %s285 = scalar_lea.vmem [#allocation11], 8
    %286 = vst [vmem:[%s285] sm:$0xff] %v283
    %s287 = scalar_lea.vmem [#allocation2], 16
    %v288 = vld [vmem:[%s287] sm:$0xff]
    %289 = vmatpush.msra.mxu0 0.0
    %290 = vmatpush.msra.mxu0 0.0
    %291 = vmatpush.msra.mxu0 0.0
    %292 = vmatpush.msra.mxu0 0.0
    %293 = vmatpush.msra.mxu0 0.0
    %294 = vmatpush.msra.mxu0 0.0
    %295 = vmatpush.msra.mxu0 0.0
    %296 = vmatpush.msra.mxu0 0.0
    %297 = vmatpush.msra.mxu0 0.0
    %298 = vmatpush.msra.mxu0 0.0
    %299 = vmatpush.msra.mxu0 0.0
    %300 = vmatpush.msra.mxu0 0.0
    %301 = vmatpush.msra.mxu0 %v179
    %302 = vmatpush.msra.mxu0 %v178
    %303 = vmatpush.msra.mxu0 %v177
    %304 = vmatpush.msra.mxu0 %v176
    %305 = vmatmul.f32.gmra.mxu0 %v263
    %v306 = vpop.f32.mrf.mxu0
    %v307 = vadd.f32 0.0, %v306
    %308 = vdwg.mxu0
    %v309 = vadd.f32 %v288, %v307
    %v310 = vtanh.pop %v309
    %v312 = vsel %vm167, %v310, 0
    %314 = vmatpush.msra.mxu0 0.0
    %315 = vmatpush.msra.mxu0 0.0
    %316 = vmatpush.msra.mxu0 0.0
    %317 = vmatpush.msra.mxu0 0.0
    %318 = vmatpush.msra.mxu0 0.0
    %319 = vmatpush.msra.mxu0 0.0
    %320 = vmatpush.msra.mxu0 0.0
    %321 = vmatpush.msra.mxu0 0.0
    %322 = vmatpush.msra.mxu0 0.0
    %323 = vmatpush.msra.mxu0 0.0
    %324 = vmatpush.msra.mxu0 0.0
    %325 = vmatpush.msra.mxu0 0.0
    %326 = vmatpush.msra.mxu0 %v183
    %327 = vmatpush.msra.mxu0 %v182
    %328 = vmatpush.msra.mxu0 %v181
    %329 = vmatpush.msra.mxu0 %v180
    %330 = vmatmul.f32.gmra.mxu0 %v312
    %v331 = vpop.f32.mrf.mxu0
    %v332 = vadd.f32 %v212, %v331
    %333 = vdwg.mxu0
    %s334 = scalar_lea.vmem [#allocation11], 16
    %335 = vst [vmem:[%s334] sm:$0xff] %v332
    %s336 = scalar_lea.vmem [#allocation2], 24
    %v337 = vld [vmem:[%s336] sm:$0xff]
    %338 = vmatpush.msra.mxu0 0.0
    %339 = vmatpush.msra.mxu0 0.0
    %340 = vmatpush.msra.mxu0 0.0
    %341 = vmatpush.msra.mxu0 0.0
    %342 = vmatpush.msra.mxu0 0.0
    %343 = vmatpush.msra.mxu0 0.0
    %344 = vmatpush.msra.mxu0 0.0
    %345 = vmatpush.msra.mxu0 0.0
    %346 = vmatpush.msra.mxu0 0.0
    %347 = vmatpush.msra.mxu0 0.0
    %348 = vmatpush.msra.mxu0 0.0
    %349 = vmatpush.msra.mxu0 0.0
    %350 = vmatpush.msra.mxu0 %v179
    %351 = vmatpush.msra.mxu0 %v178
    %352 = vmatpush.msra.mxu0 %v177
    %353 = vmatpush.msra.mxu0 %v176
    %354 = vmatmul.f32.gmra.mxu0 %v312
    %v355 = vpop.f32.mrf.mxu0
    %v356 = vadd.f32 0.0, %v355
    %357 = vdwg.mxu0
    %v358 = vadd.f32 %v337, %v356
    %v359 = vtanh.pop %v358
    %v361 = vsel %vm167, %v359, 0
    %363 = vmatpush.msra.mxu0 0.0
    %364 = vmatpush.msra.mxu0 0.0
    %365 = vmatpush.msra.mxu0 0.0
    %366 = vmatpush.msra.mxu0 0.0
    %367 = vmatpush.msra.mxu0 0.0
    %368 = vmatpush.msra.mxu0 0.0
    %369 = vmatpush.msra.mxu0 0.0
    %370 = vmatpush.msra.mxu0 0.0
    %371 = vmatpush.msra.mxu0 0.0
    %372 = vmatpush.msra.mxu0 0.0
    %373 = vmatpush.msra.mxu0 0.0
    %374 = vmatpush.msra.mxu0 0.0
    %375 = vmatpush.msra.mxu0 %v183
    %376 = vmatpush.msra.mxu0 %v182
    %377 = vmatpush.msra.mxu0 %v181
    %378 = vmatpush.msra.mxu0 %v180
    %379 = vmatmul.f32.gmra.mxu0 %v361
    %v380 = vpop.f32.mrf.mxu0
    %v381 = vadd.f32 %v212, %v380
    %382 = vdwg.mxu0
    %s383 = scalar_lea.vmem [#allocation11], 24
    %384 = vst [vmem:[%s383] sm:$0xff] %v381
    %s385 = scalar_lea.vmem [#allocation2], 32
    %v386 = vld [vmem:[%s385] sm:$0xff]
    %387 = vmatpush.msra.mxu0 0.0
    %388 = vmatpush.msra.mxu0 0.0
    %389 = vmatpush.msra.mxu0 0.0
    %390 = vmatpush.msra.mxu0 0.0
    %391 = vmatpush.msra.mxu0 0.0
    %392 = vmatpush.msra.mxu0 0.0
    %393 = vmatpush.msra.mxu0 0.0
    %394 = vmatpush.msra.mxu0 0.0
    %395 = vmatpush.msra.mxu0 0.0
    %396 = vmatpush.msra.mxu0 0.0
    %397 = vmatpush.msra.mxu0 0.0
    %398 = vmatpush.msra.mxu0 0.0
    %399 = vmatpush.msra.mxu0 %v179
    %400 = vmatpush.msra.mxu0 %v178
    %401 = vmatpush.msra.mxu0 %v177
    %402 = vmatpush.msra.mxu0 %v176
    %403 = vmatmul.f32.gmra.mxu0 %v361
    %v404 = vpop.f32.mrf.mxu0
    %v405 = vadd.f32 0.0, %v404
    %406 = vdwg.mxu0
    %v407 = vadd.f32 %v386, %v405
    %v408 = vtanh.pop %v407
    %v410 = vsel %vm167, %v408, 0
    %412 = vmatpush.msra.mxu0 0.0
    %413 = vmatpush.msra.mxu0 0.0
    %414 = vmatpush.msra.mxu0 0.0
    %415 = vmatpush.msra.mxu0 0.0
    %416 = vmatpush.msra.mxu0 0.0
    %417 = vmatpush.msra.mxu0 0.0
    %418 = vmatpush.msra.mxu0 0.0
    %419 = vmatpush.msra.mxu0 0.0
    %420 = vmatpush.msra.mxu0 0.0
    %421 = vmatpush.msra.mxu0 0.0
    %422 = vmatpush.msra.mxu0 0.0
    %423 = vmatpush.msra.mxu0 0.0
    %424 = vmatpush.msra.mxu0 %v183
    %425 = vmatpush.msra.mxu0 %v182
    %426 = vmatpush.msra.mxu0 %v181
    %427 = vmatpush.msra.mxu0 %v180
    %428 = vmatmul.f32.gmra.mxu0 %v410
    %v429 = vpop.f32.mrf.mxu0
    %v430 = vadd.f32 %v212, %v429
    %431 = vdwg.mxu0
    %s432 = scalar_lea.vmem [#allocation11], 32
    %433 = vst [vmem:[%s432] sm:$0xff] %v430
    %s434 = scalar_lea.vmem [#allocation2], 40
    %v435 = vld [vmem:[%s434] sm:$0xff]
    %436 = vmatpush.msra.mxu0 0.0
    %437 = vmatpush.msra.mxu0 0.0
    %438 = vmatpush.msra.mxu0 0.0
    %439 = vmatpush.msra.mxu0 0.0
    %440 = vmatpush.msra.mxu0 0.0
    %441 = vmatpush.msra.mxu0 0.0
    %442 = vmatpush.msra.mxu0 0.0
    %443 = vmatpush.msra.mxu0 0.0
    %444 = vmatpush.msra.mxu0 0.0
    %445 = vmatpush.msra.mxu0 0.0
    %446 = vmatpush.msra.mxu0 0.0
    %447 = vmatpush.msra.mxu0 0.0
    %448 = vmatpush.msra.mxu0 %v179
    %449 = vmatpush.msra.mxu0 %v178
    %450 = vmatpush.msra.mxu0 %v177
    %451 = vmatpush.msra.mxu0 %v176
    %452 = vmatmul.f32.gmra.mxu0 %v410
    %v453 = vpop.f32.mrf.mxu0
    %v454 = vadd.f32 0.0, %v453
    %455 = vdwg.mxu0
    %v456 = vadd.f32 %v435, %v454
    %v457 = vtanh.pop %v456
    %v459 = vsel %vm167, %v457, 0
    %461 = vmatpush.msra.mxu0 0.0
    %462 = vmatpush.msra.mxu0 0.0
    %463 = vmatpush.msra.mxu0 0.0
    %464 = vmatpush.msra.mxu0 0.0
    %465 = vmatpush.msra.mxu0 0.0
    %466 = vmatpush.msra.mxu0 0.0
    %467 = vmatpush.msra.mxu0 0.0
    %468 = vmatpush.msra.mxu0 0.0
    %469 = vmatpush.msra.mxu0 0.0
    %470 = vmatpush.msra.mxu0 0.0
    %471 = vmatpush.msra.mxu0 0.0
    %472 = vmatpush.msra.mxu0 0.0
    %473 = vmatpush.msra.mxu0 %v183
    %474 = vmatpush.msra.mxu0 %v182
    %475 = vmatpush.msra.mxu0 %v181
    %476 = vmatpush.msra.mxu0 %v180
    %477 = vmatmul.f32.gmra.mxu0 %v459
    %v478 = vpop.f32.mrf.mxu0
    %v479 = vadd.f32 %v212, %v478
    %480 = vdwg.mxu0
    %s481 = scalar_lea.vmem [#allocation11], 40
    %482 = vst [vmem:[%s481] sm:$0xff] %v479
    %s483 = scalar_lea.vmem [#allocation2], 48
    %v484 = vld [vmem:[%s483] sm:$0xff]
    %485 = vmatpush.msra.mxu0 0.0
    %486 = vmatpush.msra.mxu0 0.0
    %487 = vmatpush.msra.mxu0 0.0
    %488 = vmatpush.msra.mxu0 0.0
    %489 = vmatpush.msra.mxu0 0.0
    %490 = vmatpush.msra.mxu0 0.0
    %491 = vmatpush.msra.mxu0 0.0
    %492 = vmatpush.msra.mxu0 0.0
    %493 = vmatpush.msra.mxu0 0.0
    %494 = vmatpush.msra.mxu0 0.0
    %495 = vmatpush.msra.mxu0 0.0
    %496 = vmatpush.msra.mxu0 0.0
    %497 = vmatpush.msra.mxu0 %v179
    %498 = vmatpush.msra.mxu0 %v178
    %499 = vmatpush.msra.mxu0 %v177
    %500 = vmatpush.msra.mxu0 %v176
    %501 = vmatmul.f32.gmra.mxu0 %v459
    %v502 = vpop.f32.mrf.mxu0
    %v503 = vadd.f32 0.0, %v502
    %504 = vdwg.mxu0
    %v505 = vadd.f32 %v484, %v503
    %v506 = vtanh.pop %v505
    %v508 = vsel %vm167, %v506, 0
    %510 = vmatpush.msra.mxu0 0.0
    %511 = vmatpush.msra.mxu0 0.0
    %512 = vmatpush.msra.mxu0 0.0
    %513 = vmatpush.msra.mxu0 0.0
    %514 = vmatpush.msra.mxu0 0.0
    %515 = vmatpush.msra.mxu0 0.0
    %516 = vmatpush.msra.mxu0 0.0
    %517 = vmatpush.msra.mxu0 0.0
    %518 = vmatpush.msra.mxu0 0.0
    %519 = vmatpush.msra.mxu0 0.0
    %520 = vmatpush.msra.mxu0 0.0
    %521 = vmatpush.msra.mxu0 0.0
    %522 = vmatpush.msra.mxu0 %v183
    %523 = vmatpush.msra.mxu0 %v182
    %524 = vmatpush.msra.mxu0 %v181
    %525 = vmatpush.msra.mxu0 %v180
    %526 = vmatmul.f32.gmra.mxu0 %v508
    %v527 = vpop.f32.mrf.mxu0
    %v528 = vadd.f32 %v212, %v527
    %529 = vdwg.mxu0
    %s530 = scalar_lea.vmem [#allocation11], 48
    %531 = vst [vmem:[%s530] sm:$0xff] %v528
    %s532 = scalar_lea.vmem [#allocation2], 56
    %v533 = vld [vmem:[%s532] sm:$0xff]
    %534 = vmatpush.msra.mxu0 0.0
    %535 = vmatpush.msra.mxu0 0.0
    %536 = vmatpush.msra.mxu0 0.0
    %537 = vmatpush.msra.mxu0 0.0
    %538 = vmatpush.msra.mxu0 0.0
    %539 = vmatpush.msra.mxu0 0.0
    %540 = vmatpush.msra.mxu0 0.0
    %541 = vmatpush.msra.mxu0 0.0
    %542 = vmatpush.msra.mxu0 0.0
    %543 = vmatpush.msra.mxu0 0.0
    %544 = vmatpush.msra.mxu0 0.0
    %545 = vmatpush.msra.mxu0 0.0
    %546 = vmatpush.msra.mxu0 %v179
    %547 = vmatpush.msra.mxu0 %v178
    %548 = vmatpush.msra.mxu0 %v177
    %549 = vmatpush.msra.mxu0 %v176
    %550 = vmatmul.f32.gmra.mxu0 %v508
    %v551 = vpop.f32.mrf.mxu0
    %v552 = vadd.f32 0.0, %v551
    %553 = vdwg.mxu0
    %v554 = vadd.f32 %v533, %v552
    %v555 = vtanh.pop %v554
    %v557 = vsel %vm167, %v555, 0
    %559 = vmatpush.msra.mxu0 0.0
    %560 = vmatpush.msra.mxu0 0.0
    %561 = vmatpush.msra.mxu0 0.0
    %562 = vmatpush.msra.mxu0 0.0
    %563 = vmatpush.msra.mxu0 0.0
    %564 = vmatpush.msra.mxu0 0.0
    %565 = vmatpush.msra.mxu0 0.0
    %566 = vmatpush.msra.mxu0 0.0
    %567 = vmatpush.msra.mxu0 0.0
    %568 = vmatpush.msra.mxu0 0.0
    %569 = vmatpush.msra.mxu0 0.0
    %570 = vmatpush.msra.mxu0 0.0
    %571 = vmatpush.msra.mxu0 %v183
    %572 = vmatpush.msra.mxu0 %v182
    %573 = vmatpush.msra.mxu0 %v181
    %574 = vmatpush.msra.mxu0 %v180
    %575 = vmatmul.f32.gmra.mxu0 %v557
    %v576 = vpop.f32.mrf.mxu0
    %v577 = vadd.f32 %v212, %v576
    %578 = vdwg.mxu0
    %s579 = scalar_lea.vmem [#allocation11], 56
    %580 = vst [vmem:[%s579] sm:$0xff] %v577
    // Predicated region
    $region42: #{tpu_custom_call.1} parent=1 // pred_check
      _
    $region43: #{tpu_custom_call.1} parent=1 // pred_check_branch
      %582 = sbr.rel (0) target = $region45
    $region44: #{tpu_custom_call.1} parent=1 // pred_region
      %584 = vsyncadd [#allocation5], 0
      %s585 = sshll.u32 [#allocation11], 4
      %s586 = int_to_ptr.vmem [resolvable:$true] %s585
      %s587 = sshll.u32 %s6, 4
      %s588 = int_to_ptr.hbm [resolvable:$true] %s587
      %593 = dma.vmem_to_hbm [thread:$0]  %s586, 1024, %s588, [#allocation5], 128, 128, 8
    $region45: #{tpu_custom_call.1} parent=1 // pred_fallthru
      _
    // Predicated region
    $region46: #{tpu_custom_call.1} parent=1 // pred_check
      _
    $region47: #{tpu_custom_call.1} parent=1 // pred_check_branch
      %595 = sbr.rel (0) target = $region49
    $region48: #{tpu_custom_call.1} parent=1 // pred_region
      %597 = dma.done [#allocation5], 1024
    $region49: #{tpu_custom_call.1} parent=1 // pred_fallthru
      _
    %598 = vsyncpa [#allocation4], 1
    %599 = vsyncpa [#allocation7], 1
    %600 = vsyncpa [#allocation10], 1
    %601 = vsyncpa [#allocation5], 1

</llo_original>
